<compile_context>
chip_gen: v6e
topology: v6e:2x2x1
jax: 0.10.0
libtpu: 0.0.40
codegen_flags: <defaults>
</compile_context>

<pallas_src>
import functools

import jax
import jax.numpy as jnp
from jax.experimental import pallas as pl
from jax.experimental.pallas import tpu as pltpu

LANE = 128          # TPU lane width; every feature dim is padded to this.
BATCH_ALIGN = 16    # sublane alignment for bf16-packed batch tiles.


def _round_up(n, m):
    return ((n + m - 1) // m) * m


def _cdiv(a, b):
    return -(-a // b)


# ---------------------------------------------------------------------------
# Kernel: 4 fused matmuls over pre-packed weight / bias slabs.
#   operands bf16 -> MXU, accumulate / bias / ReLU in f32.
# ---------------------------------------------------------------------------
def _dueling_kernel(x_ref, w_ref, b_ref, out_ref, *, s_pad):
    r1 = s_pad           # end of layer-1 weight rows
    r2 = r1 + LANE       # end of layer-2 weight rows
    r3 = r2 + LANE       # end of fused layer-3 weight rows
    r4 = r3 + LANE       # end of fused head weight rows

    x = x_ref[...]                                                   # bf16 (BM, s_pad)

    # fc1 + ReLU
    h = jnp.dot(x, w_ref[0:r1, :], preferred_element_type=jnp.float32) + b_ref[0:1, :]
    h = jnp.maximum(h, 0.0)

    # fc2 + ReLU
    h = jnp.dot(h.astype(jnp.bfloat16), w_ref[r1:r2, :],
                preferred_element_type=jnp.float32) + b_ref[1:2, :]
    h = jnp.maximum(h, 0.0)

    # fused fc3_val | fc3_adv + ReLU   (value stream lanes [0:32], adv [32:64])
    h = jnp.dot(h.astype(jnp.bfloat16), w_ref[r2:r3, :],
                preferred_element_type=jnp.float32) + b_ref[2:3, :]
    h = jnp.maximum(h, 0.0)

    # fused head: fc4_val + fc4_adv + dueling mean-subtraction (pre-folded)
    out_ref[...] = (
        jnp.dot(h.astype(jnp.bfloat16), w_ref[r3:r4, :],
                preferred_element_type=jnp.float32) + b_ref[3:4, :]
    )


# ---------------------------------------------------------------------------
# Host-side packing of the 6 Linear layers into 2 VMEM slabs.
# ---------------------------------------------------------------------------
def pack_params(params, state_size):
    """Pack weights into one bf16 (s_pad + 3*128, 128) slab, biases into f32 (8, 128).

    Weights are stored (in_features, out_features). Unused lanes/rows are zero,
    which keeps the padded activation lanes exactly zero through every ReLU.
    """
    fc1 = params["w1"].shape[1]
    fc2 = params["w2"].shape[1]
    fc3 = params["w3v"].shape[1]
    act = params["w4a"].shape[1]
    assert fc1 <= LANE and fc2 <= LANE and 2 * fc3 <= LANE and act <= LANE

    s_pad = _round_up(state_size, BATCH_ALIGN)

    w1 = jnp.zeros((s_pad, LANE), jnp.float32).at[:state_size, :fc1].set(params["w1"])
    w2 = jnp.zeros((LANE, LANE), jnp.float32).at[:fc1, :fc2].set(params["w2"])
    w3 = (
        jnp.zeros((LANE, LANE), jnp.float32)
        .at[:fc2, :fc3].set(params["w3v"])
        .at[:fc2, fc3:2 * fc3].set(params["w3a"])
    )
    # Head fold:
    #   q_j = [v|a] @ [w4v ; w4a[:,j] - mean_k w4a[:,k]] + (b4v + b4a[j] - mean(b4a))
    adv_centered = params["w4a"] - jnp.mean(params["w4a"], axis=1, keepdims=True)
    w4 = (
        jnp.zeros((LANE, LANE), jnp.float32)
        .at[:fc3, :act].set(jnp.broadcast_to(params["w4v"], (fc3, act)))
        .at[fc3:2 * fc3, :act].set(adv_centered)
    )
    w_slab = jnp.concatenate([w1, w2, w3, w4], axis=0).astype(jnp.bfloat16)

    b_head = params["b4v"] + params["b4a"] - jnp.mean(params["b4a"])   # (1, act)
    b_slab = (
        jnp.zeros((8, LANE), jnp.float32)
        .at[0, :fc1].set(params["b1"][0])
        .at[1, :fc2].set(params["b2"][0])
        .at[2, :fc3].set(params["b3v"][0])
        .at[2, fc3:2 * fc3].set(params["b3a"][0])
        .at[3, :act].set(b_head[0])
    )
    return w_slab, b_slab


# ---------------------------------------------------------------------------
# Batch-tile selection: big tiles (amortize ~0.35 us/step), balanced across
# steps (bounded tail waste), and >=2 steps for mid/large batches so v7x's
# two TensorCores both get a share of the "parallel" batch axis.
# ---------------------------------------------------------------------------
def _choose_bm(batch, block_batch, align=BATCH_ALIGN, split_threshold=256):
    batch = max(int(batch), 1)
    n_steps = _cdiv(batch, max(int(block_batch), align))
    if batch >= split_threshold:
        n_steps = max(n_steps, 2)
    return _round_up(_cdiv(batch, n_steps), align)


# ---------------------------------------------------------------------------
# Wrapper: batch-tiled pallas_call, lane-dense output.
# ---------------------------------------------------------------------------
def dueling_q_forward(x, w_slab, b_slab, action_size, *, block_batch=1024,
                      return_padded=False):
    batch, state_size = x.shape
    s_pad = w_slab.shape[0] - 3 * LANE

    bm = _choose_bm(batch, block_batch)
    b_pad = _round_up(batch, bm)
    grid = (b_pad // bm,)

    x_bf16 = x.astype(jnp.bfloat16)
    if batch != b_pad or state_size != s_pad:
        x_in = jnp.zeros((b_pad, s_pad), jnp.bfloat16).at[:batch, :state_size].set(x_bf16)
    else:
        x_in = x_bf16

    def run(resident_kwargs):
        in_specs = [
            pl.BlockSpec((bm, s_pad), lambda i: (i, 0)),                         # x: tiled over batch
            pl.BlockSpec((w_slab.shape[0], LANE), lambda i: (0, 0),              # weights: resident
                         **resident_kwargs),
            pl.BlockSpec((8, LANE), lambda i: (0, 0), **resident_kwargs),        # biases: resident
        ]
        return pl.pallas_call(
            functools.partial(_dueling_kernel, s_pad=s_pad),
            out_shape=jax.ShapeDtypeStruct((b_pad, LANE), jnp.float32),
            grid=grid,
            in_specs=in_specs,
            out_specs=pl.BlockSpec((bm, LANE), lambda i: (i, 0)),                # lane-dense store
            compiler_params=pltpu.CompilerParams(dimension_semantics=("parallel",)),
        )(x_in, w_slab, b_slab)

    try:
        # Constant-index blocks never change: single-buffer them (saves VMEM + a DMA).
        out = run({"pipeline_mode": pl.Buffered(1)})
    except Exception:
        out = run({})

    if return_padded or (batch == b_pad and action_size == LANE):
        return out
    return out[:batch, :action_size]


# ---------------------------------------------------------------------------
# Init + pure-JAX reference (mirrors the PyTorch module semantics).
# ---------------------------------------------------------------------------
def init_params(key, state_size, action_size, fc1_units=64, fc2_units=64, fc3_units=32):
    """PyTorch Linear default init: U(-1/sqrt(fan_in), 1/sqrt(fan_in)); weights (in, out)."""
    def linear(key, fan_in, fan_out):
        kw, kb = jax.random.split(key)
        bound = 1.0 / jnp.sqrt(float(fan_in))
        w = jax.random.uniform(kw, (fan_in, fan_out), jnp.float32, -bound, bound)
        b = jax.random.uniform(kb, (1, fan_out), jnp.float32, -bound, bound)
        return w, b

    keys = jax.random.split(key, 6)
    w1, b1 = linear(keys[0], state_size, fc1_units)
    w2, b2 = linear(keys[1], fc1_units, fc2_units)
    w3v, b3v = linear(keys[2], fc2_units, fc3_units)
    w4v, b4v = linear(keys[3], fc3_units, 1)
    w3a, b3a = linear(keys[4], fc2_units, fc3_units)
    w4a, b4a = linear(keys[5], fc3_units, action_size)
    return dict(w1=w1, b1=b1, w2=w2, b2=b2, w3v=w3v, b3v=b3v, w4v=w4v, b4v=b4v,
                w3a=w3a, b3a=b3a, w4a=w4a, b4a=b4a)


def reference_forward(x, p):
    h1 = jax.nn.relu(x @ p["w1"] + p["b1"])
    h2 = jax.nn.relu(h1 @ p["w2"] + p["b2"])
    v = jax.nn.relu(h2 @ p["w3v"] + p["b3v"])
    val = v @ p["w4v"] + p["b4v"]
    a = jax.nn.relu(h2 @ p["w3a"] + p["b3a"])
    adv = a @ p["w4a"] + p["b4a"]
    return val + adv - jnp.mean(adv, axis=1, keepdims=True)


if __name__ == "__main__":
    state_size = 8
    action_size = 4
    batch = 2

    key = jax.random.PRNGKey(0)
    k_params, k_x = jax.random.split(key)
    params = init_params(k_params, state_size, action_size)
    x = jax.random.normal(k_x, (batch, state_size), jnp.float32)

    w_slab, b_slab = pack_params(params, state_size)
    q = dueling_q_forward(x, w_slab, b_slab, action_size)
    q = jax.block_until_ready(q)

    q_ref = reference_forward(x, params)
    assert q.shape == (batch, action_size), q.shape
    # bf16 operands (f32 accumulation) -> compare at bf16-level tolerance.
    assert jnp.allclose(q, q_ref, atol=3e-2, rtol=3e-2), (q, q_ref)

    print("KERNEL_OK")
</pallas_src>

<mosaic_0001>
module attributes {stable_mosaic.version = 11 : i64} {
  func.func @_dueling_kernel(%arg0: i32, %arg1: memref<16x16xbf16, #tpu.memory_space<vmem>>, %arg2: memref<400x128xbf16, #tpu.memory_space<vmem>>, %arg3: memref<8x128xf32, #tpu.memory_space<vmem>>, %arg4: memref<16x128xf32, #tpu.memory_space<vmem>>) attributes {dimension_semantics = [#tpu.dimension_semantics<parallel>], iteration_bounds = array<i64: 1>, scalar_prefetch = 0 : i64, scratch_operands = 0 : i64, tpu.core_type = #tpu.core_type<tc>, window_params = [{transform_indices = @transform_0, window_bounds = array<i64: 16, 16>}, {pipeline_mode = #tpu.pipeline_mode<synchronous>, transform_indices = @transform_1, window_bounds = array<i64: 400, 128>}, {pipeline_mode = #tpu.pipeline_mode<synchronous>, transform_indices = @transform_2, window_bounds = array<i64: 8, 128>}, {transform_indices = @transform_3, window_bounds = array<i64: 16, 128>}]} {
    %c0 = arith.constant 0 : index
    %c0_0 = arith.constant 0 : index
    %0 = vector.load %arg1[%c0, %c0_0] : memref<16x16xbf16, #tpu.memory_space<vmem>>, vector<16x16xbf16>
    %c0_1 = arith.constant 0 : index
    %c0_2 = arith.constant 0 : index
    %1 = vector.load %arg2[%c0_1, %c0_2] : memref<400x128xbf16, #tpu.memory_space<vmem>>, vector<16x128xbf16>
    %cst = arith.constant dense<0.000000e+00> : vector<16x128xf32>
    %2 = tpu.matmul %0, %1, %cst {dimension_numbers = #tpu.dot_dimension_numbers<[1], [0], [0], [1], [0, 0, 1, 1], [], []>} : vector<16x16xbf16>, vector<16x128xbf16>, vector<16x128xf32> -> vector<16x128xf32>
    %c0_3 = arith.constant 0 : index
    %c0_4 = arith.constant 0 : index
    %3 = vector.load %arg3[%c0_3, %c0_4] : memref<8x128xf32, #tpu.memory_space<vmem>>, vector<1x128xf32>
    %4 = vector.broadcast %3 : vector<1x128xf32> to vector<16x128xf32>
    %5 = arith.addf %2, %4 : vector<16x128xf32>
    %cst_5 = arith.constant 0.000000e+00 : f32
    %6 = vector.broadcast %cst_5 : f32 to vector<16x128xf32>
    %7 = arith.maximumf %5, %6 : vector<16x128xf32>
    %8 = arith.truncf %7 : vector<16x128xf32> to vector<16x128xbf16>
    %c16 = arith.constant 16 : index
    %c0_6 = arith.constant 0 : index
    %9 = vector.load %arg2[%c16, %c0_6] : memref<400x128xbf16, #tpu.memory_space<vmem>>, vector<128x128xbf16>
    %cst_7 = arith.constant dense<0.000000e+00> : vector<16x128xf32>
    %10 = tpu.matmul %8, %9, %cst_7 {dimension_numbers = #tpu.dot_dimension_numbers<[1], [0], [0], [1], [0, 0, 1, 1], [], []>} : vector<16x128xbf16>, vector<128x128xbf16>, vector<16x128xf32> -> vector<16x128xf32>
    %c1 = arith.constant 1 : index
    %c0_8 = arith.constant 0 : index
    %11 = vector.load %arg3[%c1, %c0_8] : memref<8x128xf32, #tpu.memory_space<vmem>>, vector<1x128xf32>
    %12 = vector.broadcast %11 : vector<1x128xf32> to vector<16x128xf32>
    %13 = arith.addf %10, %12 : vector<16x128xf32>
    %cst_9 = arith.constant 0.000000e+00 : f32
    %14 = vector.broadcast %cst_9 : f32 to vector<16x128xf32>
    %15 = arith.maximumf %13, %14 : vector<16x128xf32>
    %16 = arith.truncf %15 : vector<16x128xf32> to vector<16x128xbf16>
    %c144 = arith.constant 144 : index
    %c0_10 = arith.constant 0 : index
    %17 = vector.load %arg2[%c144, %c0_10] : memref<400x128xbf16, #tpu.memory_space<vmem>>, vector<128x128xbf16>
    %cst_11 = arith.constant dense<0.000000e+00> : vector<16x128xf32>
    %18 = tpu.matmul %16, %17, %cst_11 {dimension_numbers = #tpu.dot_dimension_numbers<[1], [0], [0], [1], [0, 0, 1, 1], [], []>} : vector<16x128xbf16>, vector<128x128xbf16>, vector<16x128xf32> -> vector<16x128xf32>
    %c2 = arith.constant 2 : index
    %c0_12 = arith.constant 0 : index
    %19 = vector.load %arg3[%c2, %c0_12] : memref<8x128xf32, #tpu.memory_space<vmem>>, vector<1x128xf32>
    %20 = vector.broadcast %19 : vector<1x128xf32> to vector<16x128xf32>
    %21 = arith.addf %18, %20 : vector<16x128xf32>
    %cst_13 = arith.constant 0.000000e+00 : f32
    %22 = vector.broadcast %cst_13 : f32 to vector<16x128xf32>
    %23 = arith.maximumf %21, %22 : vector<16x128xf32>
    %24 = arith.truncf %23 : vector<16x128xf32> to vector<16x128xbf16>
    %c272 = arith.constant 272 : index
    %c0_14 = arith.constant 0 : index
    %25 = vector.load %arg2[%c272, %c0_14] : memref<400x128xbf16, #tpu.memory_space<vmem>>, vector<128x128xbf16>
    %cst_15 = arith.constant dense<0.000000e+00> : vector<16x128xf32>
    %26 = tpu.matmul %24, %25, %cst_15 {dimension_numbers = #tpu.dot_dimension_numbers<[1], [0], [0], [1], [0, 0, 1, 1], [], []>} : vector<16x128xbf16>, vector<128x128xbf16>, vector<16x128xf32> -> vector<16x128xf32>
    %c3 = arith.constant 3 : index
    %c0_16 = arith.constant 0 : index
    %27 = vector.load %arg3[%c3, %c0_16] : memref<8x128xf32, #tpu.memory_space<vmem>>, vector<1x128xf32>
    %28 = vector.broadcast %27 : vector<1x128xf32> to vector<16x128xf32>
    %29 = arith.addf %26, %28 : vector<16x128xf32>
    %c0_17 = arith.constant 0 : index
    %c0_18 = arith.constant 0 : index
    %30 = vector.load %arg4[%c0_17, %c0_18] : memref<16x128xf32, #tpu.memory_space<vmem>>, vector<16x128xf32>
    tpu.vector_store %arg4[%c0_17, %c0_18], %29 {strides = array<i32>} : memref<16x128xf32, #tpu.memory_space<vmem>>, vector<16x128xf32>,
    return
  }
  func.func @transform_0(%arg0: i32) -> (i32, i32) {
    %c0_i32 = arith.constant 0 : i32
    %c0_i32_0 = arith.constant 0 : i32
    return %arg0, %c0_i32 : i32, i32
  }
  func.func @transform_1(%arg0: i32) -> (i32, i32) {
    %c0_i32 = arith.constant 0 : i32
    %c0_i32_0 = arith.constant 0 : i32
    %c0_i32_1 = arith.constant 0 : i32
    return %c0_i32, %c0_i32_0 : i32, i32
  }
  func.func @transform_2(%arg0: i32) -> (i32, i32) {
    %c0_i32 = arith.constant 0 : i32
    %c0_i32_0 = arith.constant 0 : i32
    %c0_i32_1 = arith.constant 0 : i32
    return %c0_i32, %c0_i32_0 : i32, i32
  }
  func.func @transform_3(%arg0: i32) -> (i32, i32) {
    %c0_i32 = arith.constant 0 : i32
    %c0_i32_0 = arith.constant 0 : i32
    return %arg0, %c0_i32 : i32, i32
  }
}

module attributes {stable_mosaic.version = 11 : i64} {
  func.func @_dueling_kernel(%arg0: i32, %arg1: memref<16x16xbf16, #tpu.memory_space<vmem>>, %arg2: memref<400x128xbf16, #tpu.memory_space<vmem>>, %arg3: memref<8x128xf32, #tpu.memory_space<vmem>>, %arg4: memref<16x128xf32, #tpu.memory_space<vmem>>) attributes {dimension_semantics = [#tpu.dimension_semantics<parallel>], iteration_bounds = array<i64: 1>, scalar_prefetch = 0 : i64, scratch_operands = 0 : i64, tpu.core_type = #tpu.core_type<tc>, window_params = [{transform_indices = @transform_0, window_bounds = array<i64: 16, 16>}, {pipeline_mode = #tpu.pipeline_mode<synchronous>, transform_indices = @transform_1, window_bounds = array<i64: 400, 128>}, {pipeline_mode = #tpu.pipeline_mode<synchronous>, transform_indices = @transform_2, window_bounds = array<i64: 8, 128>}, {transform_indices = @transform_3, window_bounds = array<i64: 16, 128>}]} {
    %c0 = arith.constant 0 : index
    %c0_0 = arith.constant 0 : index
    %0 = vector.load %arg1[%c0, %c0_0] : memref<16x16xbf16, #tpu.memory_space<vmem>>, vector<16x16xbf16>
    %c0_1 = arith.constant 0 : index
    %c0_2 = arith.constant 0 : index
    %1 = vector.load %arg2[%c0_1, %c0_2] : memref<400x128xbf16, #tpu.memory_space<vmem>>, vector<16x128xbf16>
    %cst = arith.constant dense<0.000000e+00> : vector<16x128xf32>
    %2 = tpu.matmul %0, %1, %cst {dimension_numbers = #tpu.dot_dimension_numbers<[1], [0], [0], [1], [0, 0, 1, 1], [], []>} : vector<16x16xbf16>, vector<16x128xbf16>, vector<16x128xf32> -> vector<16x128xf32>
    %c0_3 = arith.constant 0 : index
    %c0_4 = arith.constant 0 : index
    %3 = vector.load %arg3[%c0_3, %c0_4] : memref<8x128xf32, #tpu.memory_space<vmem>>, vector<1x128xf32>
    %4 = vector.broadcast %3 : vector<1x128xf32> to vector<16x128xf32>
    %5 = arith.addf %2, %4 : vector<16x128xf32>
    %cst_5 = arith.constant 0.000000e+00 : f32
    %6 = vector.broadcast %cst_5 : f32 to vector<16x128xf32>
    %7 = arith.maximumf %5, %6 : vector<16x128xf32>
    %8 = arith.truncf %7 : vector<16x128xf32> to vector<16x128xbf16>
    %c16 = arith.constant 16 : index
    %c0_6 = arith.constant 0 : index
    %9 = vector.load %arg2[%c16, %c0_6] : memref<400x128xbf16, #tpu.memory_space<vmem>>, vector<128x128xbf16>
    %cst_7 = arith.constant dense<0.000000e+00> : vector<16x128xf32>
    %10 = tpu.matmul %8, %9, %cst_7 {dimension_numbers = #tpu.dot_dimension_numbers<[1], [0], [0], [1], [0, 0, 1, 1], [], []>} : vector<16x128xbf16>, vector<128x128xbf16>, vector<16x128xf32> -> vector<16x128xf32>
    %c1 = arith.constant 1 : index
    %c0_8 = arith.constant 0 : index
    %11 = vector.load %arg3[%c1, %c0_8] : memref<8x128xf32, #tpu.memory_space<vmem>>, vector<1x128xf32>
    %12 = vector.broadcast %11 : vector<1x128xf32> to vector<16x128xf32>
    %13 = arith.addf %10, %12 : vector<16x128xf32>
    %cst_9 = arith.constant 0.000000e+00 : f32
    %14 = vector.broadcast %cst_9 : f32 to vector<16x128xf32>
    %15 = arith.maximumf %13, %14 : vector<16x128xf32>
    %16 = arith.truncf %15 : vector<16x128xf32> to vector<16x128xbf16>
    %c144 = arith.constant 144 : index
    %c0_10 = arith.constant 0 : index
    %17 = vector.load %arg2[%c144, %c0_10] : memref<400x128xbf16, #tpu.memory_space<vmem>>, vector<128x128xbf16>
    %cst_11 = arith.constant dense<0.000000e+00> : vector<16x128xf32>
    %18 = tpu.matmul %16, %17, %cst_11 {dimension_numbers = #tpu.dot_dimension_numbers<[1], [0], [0], [1], [0, 0, 1, 1], [], []>} : vector<16x128xbf16>, vector<128x128xbf16>, vector<16x128xf32> -> vector<16x128xf32>
    %c2 = arith.constant 2 : index
    %c0_12 = arith.constant 0 : index
    %19 = vector.load %arg3[%c2, %c0_12] : memref<8x128xf32, #tpu.memory_space<vmem>>, vector<1x128xf32>
    %20 = vector.broadcast %19 : vector<1x128xf32> to vector<16x128xf32>
    %21 = arith.addf %18, %20 : vector<16x128xf32>
    %cst_13 = arith.constant 0.000000e+00 : f32
    %22 = vector.broadcast %cst_13 : f32 to vector<16x128xf32>
    %23 = arith.maximumf %21, %22 : vector<16x128xf32>
    %24 = arith.truncf %23 : vector<16x128xf32> to vector<16x128xbf16>
    %c272 = arith.constant 272 : index
    %c0_14 = arith.constant 0 : index
    %25 = vector.load %arg2[%c272, %c0_14] : memref<400x128xbf16, #tpu.memory_space<vmem>>, vector<128x128xbf16>
    %cst_15 = arith.constant dense<0.000000e+00> : vector<16x128xf32>
    %26 = tpu.matmul %24, %25, %cst_15 {dimension_numbers = #tpu.dot_dimension_numbers<[1], [0], [0], [1], [0, 0, 1, 1], [], []>} : vector<16x128xbf16>, vector<128x128xbf16>, vector<16x128xf32> -> vector<16x128xf32>
    %c3 = arith.constant 3 : index
    %c0_16 = arith.constant 0 : index
    %27 = vector.load %arg3[%c3, %c0_16] : memref<8x128xf32, #tpu.memory_space<vmem>>, vector<1x128xf32>
    %28 = vector.broadcast %27 : vector<1x128xf32> to vector<16x128xf32>
    %29 = arith.addf %26, %28 : vector<16x128xf32>
    %c0_17 = arith.constant 0 : index
    %c0_18 = arith.constant 0 : index
    %30 = vector.load %arg4[%c0_17, %c0_18] : memref<16x128xf32, #tpu.memory_space<vmem>>, vector<16x128xf32>
    tpu.vector_store %arg4[%c0_17, %c0_18], %29 {strides = array<i32>} : memref<16x128xf32, #tpu.memory_space<vmem>>, vector<16x128xf32>,
    return
  }
  func.func @transform_0(%arg0: i32) -> (i32, i32) {
    %c0_i32 = arith.constant 0 : i32
    %c0_i32_0 = arith.constant 0 : i32
    return %arg0, %c0_i32 : i32, i32
  }
  func.func @transform_1(%arg0: i32) -> (i32, i32) {
    %c0_i32 = arith.constant 0 : i32
    %c0_i32_0 = arith.constant 0 : i32
    %c0_i32_1 = arith.constant 0 : i32
    return %c0_i32, %c0_i32_0 : i32, i32
  }
  func.func @transform_2(%arg0: i32) -> (i32, i32) {
    %c0_i32 = arith.constant 0 : i32
    %c0_i32_0 = arith.constant 0 : i32
    %c0_i32_1 = arith.constant 0 : i32
    return %c0_i32, %c0_i32_0 : i32, i32
  }
  func.func @transform_3(%arg0: i32) -> (i32, i32) {
    %c0_i32 = arith.constant 0 : i32
    %c0_i32_0 = arith.constant 0 : i32
    return %arg0, %c0_i32 : i32, i32
  }
}

</mosaic_0001>

<llo_original>
// kernel: tpu_custom_call.1
$region0: #{tpu_custom_call.1}
  #allocation0 [shape = 'u32[]', space=smem, size = 0x4, offset = 0x4, fixed_abs, tag = 'smem constant byte address 0x4 - core index']
  #allocation1 [shape = 'u32[144,128]{1,0:T(1,128)}', space=vmem, size = 0x12000, scoped, tag = 'internal scratch']
  %s0 = inlined_call_operand.hbm [shape: bf16[16,16], index: 0, kind: input, shape index: {}]
  %s1 = inlined_call_operand.hbm [shape: bf16[400,128], index: 1, kind: input, shape index: {}]
  %s2 = inlined_call_operand.hbm [shape: f32[8,128], index: 2, kind: input, shape index: {}]
  %s3 = inlined_call_operand.hbm [shape: f32[16,128], index: 3, kind: output, shape index: {}]
  %s4 = sld [smem:[#allocation0]]
  $region34: #{tpu_custom_call.1} parent=0
    _
  %s6 = ssub.s32 1, %s4
  %s7 = scalar_select 0, %s6, %s4
  $region1: #{tpu_custom_call.1} parent=0
    #allocation2 [shape = 'u8[4096]{0}', space=vmem, size = 0x1000, scoped, tag = 'input window, operand 0, single buffered']
    #allocation3 [shape = 's32[1]{0}', space=sflag, size = 0x4, scoped, tag = 'scoped memory for tpu_custom_call.1']
    #allocation4 [shape = 's32[1]{0}', space=sflag, size = 0x4, scoped, tag = 'scoped memory for tpu_custom_call.1']
    #allocation5 [shape = 'u8[102400]{0}', space=vmem, size = 0x19000, scoped, tag = 'input window, operand 1, single buffered']
    #allocation6 [shape = 's32[1]{0}', space=sflag, size = 0x4, scoped, tag = 'scoped memory for tpu_custom_call.1']
    #allocation7 [shape = 'u8[4096]{0}', space=vmem, size = 0x1000, scoped, tag = 'input window, operand 2, single buffered']
    #allocation8 [shape = 'u8[8192]{0}', space=vmem, size = 0x2000, scoped, tag = 'output window, operand 0, single buffered']
    %8 = vsyncpa [#allocation3], 0
    %9 = vsyncpa [#allocation6], 0
    %10 = vsyncpa [#allocation4], 0
    // Predicated region
    $region2: #{tpu_custom_call.1} parent=1 // pred_check
      _
    $region3: #{tpu_custom_call.1} parent=1 // pred_check_branch
      %12 = sbr.rel (0) target = $region5
    $region4: #{tpu_custom_call.1} parent=1 // pred_region
      %s14 = ssub.s32 128, 128
      %15 = vsyncadd [#allocation3], %s14
      %s16 = sshll.u32 [#allocation2], 4
      %s17 = int_to_ptr.vmem [resolvable:$true] %s16
      %22 = dma.hbm_to_vmem [thread:$0]  %s0, 128, %s17, [#allocation3], 64, 64, 4
    $region5: #{tpu_custom_call.1} parent=1 // pred_fallthru
      _
    // Predicated region
    $region6: #{tpu_custom_call.1} parent=1 // pred_check
      _
    $region7: #{tpu_custom_call.1} parent=1 // pred_check_branch
      %24 = sbr.rel (0) target = $region9
    $region8: #{tpu_custom_call.1} parent=1 // pred_region
      %s26 = ssub.s32 3200, 3200
      %27 = vsyncadd [#allocation6], %s26
      %s28 = sshll.u32 [#allocation5], 4
      %s29 = int_to_ptr.vmem [resolvable:$true] %s28
      %34 = dma.hbm_to_vmem [thread:$0]  %s1, 3200, %s29, [#allocation6], 64, 64, 4
    $region9: #{tpu_custom_call.1} parent=1 // pred_fallthru
      _
    // Predicated region
    $region10: #{tpu_custom_call.1} parent=1 // pred_check
      _
    $region11: #{tpu_custom_call.1} parent=1 // pred_check_branch
      %36 = sbr.rel (0) target = $region13
    $region12: #{tpu_custom_call.1} parent=1 // pred_region
      %s38 = ssub.s32 128, 128
      %39 = vsyncadd [#allocation6], %s38
      %s41 = sshll.u32 [#allocation7], 4
      %s42 = int_to_ptr.vmem [resolvable:$true] %s41
      %44 = dma.hbm_to_vmem [thread:$0]  %s2, 128, %s42, [#allocation6]
    $region13: #{tpu_custom_call.1} parent=1 // pred_fallthru
      _
    // Predicated region
    $region14: #{tpu_custom_call.1} parent=1 // pred_check
      _
    $region15: #{tpu_custom_call.1} parent=1 // pred_check_branch
      %46 = sbr.rel (0) target = $region17
    $region16: #{tpu_custom_call.1} parent=1 // pred_region
      %47 = dma.done [#allocation3], 128
    $region17: #{tpu_custom_call.1} parent=1 // pred_fallthru
      _
    // Predicated region
    $region18: #{tpu_custom_call.1} parent=1 // pred_check
      _
    $region19: #{tpu_custom_call.1} parent=1 // pred_check_branch
      %49 = sbr.rel (0) target = $region21
    $region20: #{tpu_custom_call.1} parent=1 // pred_region
      %50 = dma.done [#allocation6], 3200
    $region21: #{tpu_custom_call.1} parent=1 // pred_fallthru
      _
    // Predicated region
    $region22: #{tpu_custom_call.1} parent=1 // pred_check
      _
    $region23: #{tpu_custom_call.1} parent=1 // pred_check_branch
      %52 = sbr.rel (0) target = $region25
    $region24: #{tpu_custom_call.1} parent=1 // pred_region
      %53 = dma.done [#allocation6], 128
    $region25: #{tpu_custom_call.1} parent=1 // pred_fallthru
      _
    %v55 = vld [vmem:[#allocation2] sm:$0xf]
    %v56 = vld [vmem:[#allocation2 + $0x4] sm:$0xf]
    %v57 = vld [vmem:[#allocation5] sm:$0xf]
    %v58 = vld [vmem:[#allocation5 + $0x4] sm:$0xf]
    %v59 = vld [vmem:[#allocation7] sm:$0x1]
    %v60 = vlaneseq
    %v61 = vshrl.u32 %v60, 7
    %v62 = vsub.s32 0, %v61
    %v63 = vrot.slane %v59, %v62
    %v66 = vunpack.c.l.b16 %v55
    %v67 = vunpack.c.l.b16 %v56
    %v68 = vpack.c.b16 %v67, %v66
    %v71 = vunpack.c.l.b16 %v57
    %v72 = vunpack.c.l.b16 %v58
    %v73 = vpack.c.b16 %v72, %v71
    %vm75 = vcmask 130048
    %v77 = vsel %vm75, %v68, 0
    %79 = vmatprep.subr.bf16.mxu0 0
    %80 = vmatpush1.bf16.msra.mxu0 0
    %81 = vmatprep.subr.bf16.mxu0 0
    %82 = vmatpush1.bf16.msra.mxu0 0
    %83 = vmatprep.subr.bf16.mxu0 0
    %84 = vmatpush1.bf16.msra.mxu0 0
    %85 = vmatprep.subr.bf16.mxu0 0
    %86 = vmatpush1.bf16.msra.mxu0 0
    %87 = vmatprep.subr.bf16.mxu0 0
    %88 = vmatpush1.bf16.msra.mxu0 0
    %89 = vmatprep.subr.bf16.mxu0 0
    %90 = vmatpush1.bf16.msra.mxu0 0
    %91 = vmatprep.subr.bf16.mxu0 0
    %92 = vmatpush1.bf16.msra.mxu0 0
    %93 = vmatprep.subr.bf16.mxu0 0
    %94 = vmatpush1.bf16.msra.mxu0 %v73
    %95 = vmatprep.subr.bf16.mxu0 0
    %96 = vmatpush2.bf16.msra.mxu0 0
    %97 = vmatprep.subr.bf16.mxu0 0
    %98 = vmatpush2.bf16.msra.mxu0 0
    %99 = vmatprep.subr.bf16.mxu0 0
    %100 = vmatpush2.bf16.msra.mxu0 0
    %101 = vmatprep.subr.bf16.mxu0 0
    %102 = vmatpush2.bf16.msra.mxu0 0
    %103 = vmatprep.subr.bf16.mxu0 0
    %104 = vmatpush2.bf16.msra.mxu0 0
    %105 = vmatprep.subr.bf16.mxu0 0
    %106 = vmatpush2.bf16.msra.mxu0 0
    %107 = vmatprep.subr.bf16.mxu0 0
    %108 = vmatpush2.bf16.msra.mxu0 0
    %109 = vmatprep.subr.bf16.mxu0 0
    %110 = vmatpush2.bf16.msra.mxu0 0
    %111 = vmatprep.mubr.bf16.mxu0 0
    %112 = vmatmul.mubr.bf16.gmra.mxu0 %v77
    %v113 = vpop.f32.mrf.mxu0
    %v114 = vadd.f32 %v63, %v113
    %v115 = vpop.f32.mrf.mxu0
    %v116 = vpop.f32.mrf.mxu0
    %v117 = vadd.f32 %v63, %v116
    %v118 = vpop.f32.mrf.mxu0
    %119 = vdwg.mxu0
    %v120 = vmax.f32 %v114, 0.0
    %v121 = vmax.f32 %v117, 0.0
    %v122 = vpack.c.bf16 %v121, %v120
    %v123 = vld [vmem:[#allocation5 + $0x8] sm:$0xf]
    %v124 = vld [vmem:[#allocation5 + $0xc] sm:$0xf]
    %v125 = vld [vmem:[#allocation5 + $0x10] sm:$0xf]
    %v126 = vld [vmem:[#allocation5 + $0x14] sm:$0xf]
    %v127 = vld [vmem:[#allocation5 + $0x18] sm:$0xf]
    %v128 = vld [vmem:[#allocation5 + $0x1c] sm:$0xf]
    %v129 = vld [vmem:[#allocation5 + $0x20] sm:$0xf]
    %v130 = vld [vmem:[#allocation5 + $0x24] sm:$0xf]
    %v131 = vld [vmem:[#allocation5 + $0x28] sm:$0xf]
    %v132 = vld [vmem:[#allocation5 + $0x2c] sm:$0xf]
    %v133 = vld [vmem:[#allocation5 + $0x30] sm:$0xf]
    %v134 = vld [vmem:[#allocation5 + $0x34] sm:$0xf]
    %v135 = vld [vmem:[#allocation5 + $0x38] sm:$0xf]
    %v136 = vld [vmem:[#allocation5 + $0x3c] sm:$0xf]
    %v137 = vld [vmem:[#allocation5 + $0x40] sm:$0xf]
    %v138 = vld [vmem:[#allocation5 + $0x44] sm:$0xf]
    %v139 = vld [vmem:[#allocation7 + $0x1] sm:$0x1]
    %v140 = vlaneseq
    %v141 = vshrl.u32 %v140, 7
    %v142 = vsub.s32 0, %v141
    %v143 = vrot.slane %v139, %v142
    %v160 = vunpack.c.l.b16 %v123
    %v161 = vunpack.c.l.b16 %v124
    %v162 = vunpack.c.l.b16 %v125
    %v163 = vunpack.c.l.b16 %v126
    %v164 = vunpack.c.l.b16 %v127
    %v165 = vunpack.c.l.b16 %v128
    %v166 = vunpack.c.l.b16 %v129
    %v167 = vunpack.c.l.b16 %v130
    %v168 = vunpack.c.l.b16 %v131
    %v169 = vunpack.c.l.b16 %v132
    %v170 = vunpack.c.l.b16 %v133
    %v171 = vunpack.c.l.b16 %v134
    %v172 = vunpack.c.l.b16 %v135
    %v173 = vunpack.c.l.b16 %v136
    %v174 = vunpack.c.l.b16 %v137
    %v175 = vunpack.c.l.b16 %v138
    %v176 = vpack.c.b16 %v161, %v160
    %v177 = vpack.c.b16 %v163, %v162
    %v178 = vpack.c.b16 %v165, %v164
    %v179 = vpack.c.b16 %v167, %v166
    %v180 = vpack.c.b16 %v169, %v168
    %v181 = vpack.c.b16 %v171, %v170
    %v182 = vpack.c.b16 %v173, %v172
    %v183 = vpack.c.b16 %v175, %v174
    %192 = vmatprep.subr.bf16.mxu0 0
    %193 = vmatpush1.bf16.msra.mxu0 %v183
    %194 = vmatprep.subr.bf16.mxu0 0
    %195 = vmatpush1.bf16.msra.mxu0 %v182
    %196 = vmatprep.subr.bf16.mxu0 0
    %197 = vmatpush1.bf16.msra.mxu0 %v181
    %198 = vmatprep.subr.bf16.mxu0 0
    %199 = vmatpush1.bf16.msra.mxu0 %v180
    %200 = vmatprep.subr.bf16.mxu0 0
    %201 = vmatpush1.bf16.msra.mxu0 %v179
    %202 = vmatprep.subr.bf16.mxu0 0
    %203 = vmatpush1.bf16.msra.mxu0 %v178
    %204 = vmatprep.subr.bf16.mxu0 0
    %205 = vmatpush1.bf16.msra.mxu0 %v177
    %206 = vmatprep.subr.bf16.mxu0 0
    %207 = vmatpush1.bf16.msra.mxu0 %v176
    %208 = vmatprep.subr.bf16.mxu0 0
    %209 = vmatpush2.bf16.msra.mxu0 0
    %210 = vmatprep.subr.bf16.mxu0 0
    %211 = vmatpush2.bf16.msra.mxu0 0
    %212 = vmatprep.subr.bf16.mxu0 0
    %213 = vmatpush2.bf16.msra.mxu0 0
    %214 = vmatprep.subr.bf16.mxu0 0
    %215 = vmatpush2.bf16.msra.mxu0 0
    %216 = vmatprep.subr.bf16.mxu0 0
    %217 = vmatpush2.bf16.msra.mxu0 0
    %218 = vmatprep.subr.bf16.mxu0 0
    %219 = vmatpush2.bf16.msra.mxu0 0
    %220 = vmatprep.subr.bf16.mxu0 0
    %221 = vmatpush2.bf16.msra.mxu0 0
    %222 = vmatprep.subr.bf16.mxu0 0
    %223 = vmatpush2.bf16.msra.mxu0 0
    %224 = vmatprep.mubr.bf16.mxu0 0
    %225 = vmatmul.mubr.bf16.gmra.mxu0 %v122
    %v226 = vpop.f32.mrf.mxu0
    %v227 = vadd.f32 %v143, %v226
    %v228 = vpop.f32.mrf.mxu0
    %v229 = vpop.f32.mrf.mxu0
    %v230 = vadd.f32 %v143, %v229
    %v231 = vpop.f32.mrf.mxu0
    %232 = vdwg.mxu0
    %v233 = vmax.f32 %v227, 0.0
    %v234 = vmax.f32 %v230, 0.0
    %v235 = vpack.c.bf16 %v234, %v233
    %v236 = vld [vmem:[#allocation5 + $0x48] sm:$0xf]
    %v237 = vld [vmem:[#allocation5 + $0x4c] sm:$0xf]
    %v238 = vld [vmem:[#allocation5 + $0x50] sm:$0xf]
    %v239 = vld [vmem:[#allocation5 + $0x54] sm:$0xf]
    %v240 = vld [vmem:[#allocation5 + $0x58] sm:$0xf]
    %v241 = vld [vmem:[#allocation5 + $0x5c] sm:$0xf]
    %v242 = vld [vmem:[#allocation5 + $0x60] sm:$0xf]
    %v243 = vld [vmem:[#allocation5 + $0x64] sm:$0xf]
    %v244 = vld [vmem:[#allocation5 + $0x68] sm:$0xf]
    %v245 = vld [vmem:[#allocation5 + $0x6c] sm:$0xf]
    %v246 = vld [vmem:[#allocation5 + $0x70] sm:$0xf]
    %v247 = vld [vmem:[#allocation5 + $0x74] sm:$0xf]
    %v248 = vld [vmem:[#allocation5 + $0x78] sm:$0xf]
    %v249 = vld [vmem:[#allocation5 + $0x7c] sm:$0xf]
    %v250 = vld [vmem:[#allocation5 + $0x80] sm:$0xf]
    %v251 = vld [vmem:[#allocation5 + $0x84] sm:$0xf]
    %v252 = vld [vmem:[#allocation7 + $0x2] sm:$0x1]
    %v253 = vlaneseq
    %v254 = vshrl.u32 %v253, 7
    %v255 = vsub.s32 0, %v254
    %v256 = vrot.slane %v252, %v255
    %v273 = vunpack.c.l.b16 %v236
    %v274 = vunpack.c.l.b16 %v237
    %v275 = vunpack.c.l.b16 %v238
    %v276 = vunpack.c.l.b16 %v239
    %v277 = vunpack.c.l.b16 %v240
    %v278 = vunpack.c.l.b16 %v241
    %v279 = vunpack.c.l.b16 %v242
    %v280 = vunpack.c.l.b16 %v243
    %v281 = vunpack.c.l.b16 %v244
    %v282 = vunpack.c.l.b16 %v245
    %v283 = vunpack.c.l.b16 %v246
    %v284 = vunpack.c.l.b16 %v247
    %v285 = vunpack.c.l.b16 %v248
    %v286 = vunpack.c.l.b16 %v249
    %v287 = vunpack.c.l.b16 %v250
    %v288 = vunpack.c.l.b16 %v251
    %v289 = vpack.c.b16 %v274, %v273
    %v290 = vpack.c.b16 %v276, %v275
    %v291 = vpack.c.b16 %v278, %v277
    %v292 = vpack.c.b16 %v280, %v279
    %v293 = vpack.c.b16 %v282, %v281
    %v294 = vpack.c.b16 %v284, %v283
    %v295 = vpack.c.b16 %v286, %v285
    %v296 = vpack.c.b16 %v288, %v287
    %305 = vmatprep.subr.bf16.mxu0 0
    %306 = vmatpush1.bf16.msra.mxu0 %v296
    %307 = vmatprep.subr.bf16.mxu0 0
    %308 = vmatpush1.bf16.msra.mxu0 %v295
    %309 = vmatprep.subr.bf16.mxu0 0
    %310 = vmatpush1.bf16.msra.mxu0 %v294
    %311 = vmatprep.subr.bf16.mxu0 0
    %312 = vmatpush1.bf16.msra.mxu0 %v293
    %313 = vmatprep.subr.bf16.mxu0 0
    %314 = vmatpush1.bf16.msra.mxu0 %v292
    %315 = vmatprep.subr.bf16.mxu0 0
    %316 = vmatpush1.bf16.msra.mxu0 %v291
    %317 = vmatprep.subr.bf16.mxu0 0
    %318 = vmatpush1.bf16.msra.mxu0 %v290
    %319 = vmatprep.subr.bf16.mxu0 0
    %320 = vmatpush1.bf16.msra.mxu0 %v289
    %321 = vmatprep.subr.bf16.mxu0 0
    %322 = vmatpush2.bf16.msra.mxu0 0
    %323 = vmatprep.subr.bf16.mxu0 0
    %324 = vmatpush2.bf16.msra.mxu0 0
    %325 = vmatprep.subr.bf16.mxu0 0
    %326 = vmatpush2.bf16.msra.mxu0 0
    %327 = vmatprep.subr.bf16.mxu0 0
    %328 = vmatpush2.bf16.msra.mxu0 0
    %329 = vmatprep.subr.bf16.mxu0 0
    %330 = vmatpush2.bf16.msra.mxu0 0
    %331 = vmatprep.subr.bf16.mxu0 0
    %332 = vmatpush2.bf16.msra.mxu0 0
    %333 = vmatprep.subr.bf16.mxu0 0
    %334 = vmatpush2.bf16.msra.mxu0 0
    %335 = vmatprep.subr.bf16.mxu0 0
    %336 = vmatpush2.bf16.msra.mxu0 0
    %337 = vmatprep.mubr.bf16.mxu0 0
    %338 = vmatmul.mubr.bf16.gmra.mxu0 %v235
    %v339 = vpop.f32.mrf.mxu0
    %v340 = vadd.f32 %v256, %v339
    %v341 = vpop.f32.mrf.mxu0
    %v342 = vpop.f32.mrf.mxu0
    %v343 = vadd.f32 %v256, %v342
    %v344 = vpop.f32.mrf.mxu0
    %345 = vdwg.mxu0
    %v346 = vmax.f32 %v340, 0.0
    %v347 = vmax.f32 %v343, 0.0
    %v348 = vpack.c.bf16 %v347, %v346
    %v349 = vld [vmem:[#allocation5 + $0x88] sm:$0xf]
    %v350 = vld [vmem:[#allocation5 + $0x8c] sm:$0xf]
    %v351 = vld [vmem:[#allocation5 + $0x90] sm:$0xf]
    %v352 = vld [vmem:[#allocation5 + $0x94] sm:$0xf]
    %v353 = vld [vmem:[#allocation5 + $0x98] sm:$0xf]
    %v354 = vld [vmem:[#allocation5 + $0x9c] sm:$0xf]
    %v355 = vld [vmem:[#allocation5 + $0xa0] sm:$0xf]
    %v356 = vld [vmem:[#allocation5 + $0xa4] sm:$0xf]
    %v357 = vld [vmem:[#allocation5 + $0xa8] sm:$0xf]
    %v358 = vld [vmem:[#allocation5 + $0xac] sm:$0xf]
    %v359 = vld [vmem:[#allocation5 + $0xb0] sm:$0xf]
    %v360 = vld [vmem:[#allocation5 + $0xb4] sm:$0xf]
    %v361 = vld [vmem:[#allocation5 + $0xb8] sm:$0xf]
    %v362 = vld [vmem:[#allocation5 + $0xbc] sm:$0xf]
    %v363 = vld [vmem:[#allocation5 + $0xc0] sm:$0xf]
    %v364 = vld [vmem:[#allocation5 + $0xc4] sm:$0xf]
    %v365 = vld [vmem:[#allocation7 + $0x3] sm:$0x1]
    %v366 = vlaneseq
    %v367 = vshrl.u32 %v366, 7
    %v368 = vsub.s32 0, %v367
    %v369 = vrot.slane %v365, %v368
    %v386 = vunpack.c.l.b16 %v349
    %v387 = vunpack.c.l.b16 %v350
    %v388 = vunpack.c.l.b16 %v351
    %v389 = vunpack.c.l.b16 %v352
    %v390 = vunpack.c.l.b16 %v353
    %v391 = vunpack.c.l.b16 %v354
    %v392 = vunpack.c.l.b16 %v355
    %v393 = vunpack.c.l.b16 %v356
    %v394 = vunpack.c.l.b16 %v357
    %v395 = vunpack.c.l.b16 %v358
    %v396 = vunpack.c.l.b16 %v359
    %v397 = vunpack.c.l.b16 %v360
    %v398 = vunpack.c.l.b16 %v361
    %v399 = vunpack.c.l.b16 %v362
    %v400 = vunpack.c.l.b16 %v363
    %v401 = vunpack.c.l.b16 %v364
    %v402 = vpack.c.b16 %v387, %v386
    %v403 = vpack.c.b16 %v389, %v388
    %v404 = vpack.c.b16 %v391, %v390
    %v405 = vpack.c.b16 %v393, %v392
    %v406 = vpack.c.b16 %v395, %v394
    %v407 = vpack.c.b16 %v397, %v396
    %v408 = vpack.c.b16 %v399, %v398
    %v409 = vpack.c.b16 %v401, %v400
    %418 = vmatprep.subr.bf16.mxu0 0
    %419 = vmatpush1.bf16.msra.mxu0 %v409
    %420 = vmatprep.subr.bf16.mxu0 0
    %421 = vmatpush1.bf16.msra.mxu0 %v408
    %422 = vmatprep.subr.bf16.mxu0 0
    %423 = vmatpush1.bf16.msra.mxu0 %v407
    %424 = vmatprep.subr.bf16.mxu0 0
    %425 = vmatpush1.bf16.msra.mxu0 %v406
    %426 = vmatprep.subr.bf16.mxu0 0
    %427 = vmatpush1.bf16.msra.mxu0 %v405
    %428 = vmatprep.subr.bf16.mxu0 0
    %429 = vmatpush1.bf16.msra.mxu0 %v404
    %430 = vmatprep.subr.bf16.mxu0 0
    %431 = vmatpush1.bf16.msra.mxu0 %v403
    %432 = vmatprep.subr.bf16.mxu0 0
    %433 = vmatpush1.bf16.msra.mxu0 %v402
    %434 = vmatprep.subr.bf16.mxu0 0
    %435 = vmatpush2.bf16.msra.mxu0 0
    %436 = vmatprep.subr.bf16.mxu0 0
    %437 = vmatpush2.bf16.msra.mxu0 0
    %438 = vmatprep.subr.bf16.mxu0 0
    %439 = vmatpush2.bf16.msra.mxu0 0
    %440 = vmatprep.subr.bf16.mxu0 0
    %441 = vmatpush2.bf16.msra.mxu0 0
    %442 = vmatprep.subr.bf16.mxu0 0
    %443 = vmatpush2.bf16.msra.mxu0 0
    %444 = vmatprep.subr.bf16.mxu0 0
    %445 = vmatpush2.bf16.msra.mxu0 0
    %446 = vmatprep.subr.bf16.mxu0 0
    %447 = vmatpush2.bf16.msra.mxu0 0
    %448 = vmatprep.subr.bf16.mxu0 0
    %449 = vmatpush2.bf16.msra.mxu0 0
    %450 = vmatprep.mubr.bf16.mxu0 0
    %451 = vmatmul.mubr.bf16.gmra.mxu0 %v348
    %v452 = vpop.f32.mrf.mxu0
    %v453 = vadd.f32 %v369, %v452
    %v454 = vpop.f32.mrf.mxu0
    %v455 = vpop.f32.mrf.mxu0
    %v456 = vadd.f32 %v369, %v455
    %v457 = vpop.f32.mrf.mxu0
    %458 = vdwg.mxu0
    %459 = vst [vmem:[#allocation8] sm:$0xff] %v453
    %460 = vst [vmem:[#allocation8 + $0x8] sm:$0xff] %v456
    // Predicated region
    $region26: #{tpu_custom_call.1} parent=1 // pred_check
      _
    $region27: #{tpu_custom_call.1} parent=1 // pred_check_branch
      %462 = sbr.rel (0) target = $region29
    $region28: #{tpu_custom_call.1} parent=1 // pred_region
      %s464 = ssub.s32 256, 256
      %465 = vsyncadd [#allocation4], %s464
      %s466 = sshll.u32 [#allocation8], 4
      %s467 = int_to_ptr.vmem [resolvable:$true] %s466
      %472 = dma.vmem_to_hbm [thread:$0]  %s467, 256, %s3, [#allocation4], 128, 128, 8
    $region29: #{tpu_custom_call.1} parent=1 // pred_fallthru
      _
    // Predicated region
    $region30: #{tpu_custom_call.1} parent=1 // pred_check
      _
    $region31: #{tpu_custom_call.1} parent=1 // pred_check_branch
      %474 = sbr.rel (0) target = $region33
    $region32: #{tpu_custom_call.1} parent=1 // pred_region
      %475 = dma.done [#allocation4], 256
    $region33: #{tpu_custom_call.1} parent=1 // pred_fallthru
      _
    %476 = vsyncpa [#allocation3], 1
    %477 = vsyncpa [#allocation6], 1
    %478 = vsyncpa [#allocation4], 1

// kernel: tpu_custom_call.1
$region0: #{tpu_custom_call.1}
  #allocation0 [shape = 'u32[]', space=smem, size = 0x4, offset = 0x4, fixed_abs, tag = 'smem constant byte address 0x4 - core index']
  #allocation1 [shape = 'u32[144,128]{1,0:T(1,128)}', space=vmem, size = 0x12000, scoped, tag = 'internal scratch']
  %s0 = inlined_call_operand.hbm [shape: bf16[16,16], index: 0, kind: input, shape index: {}]
  %s1 = inlined_call_operand.hbm [shape: bf16[400,128], index: 1, kind: input, shape index: {}]
  %s2 = inlined_call_operand.hbm [shape: f32[8,128], index: 2, kind: input, shape index: {}]
  %s3 = inlined_call_operand.hbm [shape: f32[16,128], index: 3, kind: output, shape index: {}]
  %s4 = sld [smem:[#allocation0]]
  $region34: #{tpu_custom_call.1} parent=0
    _
  %s6 = ssub.s32 1, %s4
  %s7 = scalar_select 0, %s6, %s4
  $region1: #{tpu_custom_call.1} parent=0
    #allocation2 [shape = 'u8[4096]{0}', space=vmem, size = 0x1000, scoped, tag = 'input window, operand 0, single buffered']
    #allocation3 [shape = 's32[1]{0}', space=sflag, size = 0x4, scoped, tag = 'scoped memory for tpu_custom_call.1']
    #allocation4 [shape = 's32[1]{0}', space=sflag, size = 0x4, scoped, tag = 'scoped memory for tpu_custom_call.1']
    #allocation5 [shape = 'u8[102400]{0}', space=vmem, size = 0x19000, scoped, tag = 'input window, operand 1, single buffered']
    #allocation6 [shape = 's32[1]{0}', space=sflag, size = 0x4, scoped, tag = 'scoped memory for tpu_custom_call.1']
    #allocation7 [shape = 'u8[4096]{0}', space=vmem, size = 0x1000, scoped, tag = 'input window, operand 2, single buffered']
    #allocation8 [shape = 'u8[8192]{0}', space=vmem, size = 0x2000, scoped, tag = 'output window, operand 0, single buffered']
    %8 = vsyncpa [#allocation3], 0
    %9 = vsyncpa [#allocation6], 0
    %10 = vsyncpa [#allocation4], 0
    // Predicated region
    $region2: #{tpu_custom_call.1} parent=1 // pred_check
      _
    $region3: #{tpu_custom_call.1} parent=1 // pred_check_branch
      %12 = sbr.rel (0) target = $region5
    $region4: #{tpu_custom_call.1} parent=1 // pred_region
      %s14 = ssub.s32 128, 128
      %15 = vsyncadd [#allocation3], %s14
      %s16 = sshll.u32 [#allocation2], 4
      %s17 = int_to_ptr.vmem [resolvable:$true] %s16
      %22 = dma.hbm_to_vmem [thread:$0]  %s0, 128, %s17, [#allocation3], 64, 64, 4
    $region5: #{tpu_custom_call.1} parent=1 // pred_fallthru
      _
    // Predicated region
    $region6: #{tpu_custom_call.1} parent=1 // pred_check
      _
    $region7: #{tpu_custom_call.1} parent=1 // pred_check_branch
      %24 = sbr.rel (0) target = $region9
    $region8: #{tpu_custom_call.1} parent=1 // pred_region
      %s26 = ssub.s32 3200, 3200
      %27 = vsyncadd [#allocation6], %s26
      %s28 = sshll.u32 [#allocation5], 4
      %s29 = int_to_ptr.vmem [resolvable:$true] %s28
      %34 = dma.hbm_to_vmem [thread:$0]  %s1, 3200, %s29, [#allocation6], 64, 64, 4
    $region9: #{tpu_custom_call.1} parent=1 // pred_fallthru
      _
    // Predicated region
    $region10: #{tpu_custom_call.1} parent=1 // pred_check
      _
    $region11: #{tpu_custom_call.1} parent=1 // pred_check_branch
      %36 = sbr.rel (0) target = $region13
    $region12: #{tpu_custom_call.1} parent=1 // pred_region
      %s38 = ssub.s32 128, 128
      %39 = vsyncadd [#allocation6], %s38
      %s41 = sshll.u32 [#allocation7], 4
      %s42 = int_to_ptr.vmem [resolvable:$true] %s41
      %44 = dma.hbm_to_vmem [thread:$0]  %s2, 128, %s42, [#allocation6]
    $region13: #{tpu_custom_call.1} parent=1 // pred_fallthru
      _
    // Predicated region
    $region14: #{tpu_custom_call.1} parent=1 // pred_check
      _
    $region15: #{tpu_custom_call.1} parent=1 // pred_check_branch
      %46 = sbr.rel (0) target = $region17
    $region16: #{tpu_custom_call.1} parent=1 // pred_region
      %47 = dma.done [#allocation3], 128
    $region17: #{tpu_custom_call.1} parent=1 // pred_fallthru
      _
    // Predicated region
    $region18: #{tpu_custom_call.1} parent=1 // pred_check
      _
    $region19: #{tpu_custom_call.1} parent=1 // pred_check_branch
      %49 = sbr.rel (0) target = $region21
    $region20: #{tpu_custom_call.1} parent=1 // pred_region
      %50 = dma.done [#allocation6], 3200
    $region21: #{tpu_custom_call.1} parent=1 // pred_fallthru
      _
    // Predicated region
    $region22: #{tpu_custom_call.1} parent=1 // pred_check
      _
    $region23: #{tpu_custom_call.1} parent=1 // pred_check_branch
      %52 = sbr.rel (0) target = $region25
    $region24: #{tpu_custom_call.1} parent=1 // pred_region
      %53 = dma.done [#allocation6], 128
    $region25: #{tpu_custom_call.1} parent=1 // pred_fallthru
      _
    %v55 = vld [vmem:[#allocation2] sm:$0xf]
    %v56 = vld [vmem:[#allocation2 + $0x4] sm:$0xf]
    %v57 = vld [vmem:[#allocation5] sm:$0xf]
    %v58 = vld [vmem:[#allocation5 + $0x4] sm:$0xf]
    %v59 = vld [vmem:[#allocation7] sm:$0x1]
    %v60 = vlaneseq
    %v61 = vshrl.u32 %v60, 7
    %v62 = vsub.s32 0, %v61
    %v63 = vrot.slane %v59, %v62
    %v66 = vunpack.c.l.b16 %v55
    %v67 = vunpack.c.l.b16 %v56
    %v68 = vpack.c.b16 %v67, %v66
    %v71 = vunpack.c.l.b16 %v57
    %v72 = vunpack.c.l.b16 %v58
    %v73 = vpack.c.b16 %v72, %v71
    %vm75 = vcmask 130048
    %v77 = vsel %vm75, %v68, 0
    %79 = vmatprep.subr.bf16.mxu0 0
    %80 = vmatpush1.bf16.msra.mxu0 0
    %81 = vmatprep.subr.bf16.mxu0 0
    %82 = vmatpush1.bf16.msra.mxu0 0
    %83 = vmatprep.subr.bf16.mxu0 0
    %84 = vmatpush1.bf16.msra.mxu0 0
    %85 = vmatprep.subr.bf16.mxu0 0
    %86 = vmatpush1.bf16.msra.mxu0 0
    %87 = vmatprep.subr.bf16.mxu0 0
    %88 = vmatpush1.bf16.msra.mxu0 0
    %89 = vmatprep.subr.bf16.mxu0 0
    %90 = vmatpush1.bf16.msra.mxu0 0
    %91 = vmatprep.subr.bf16.mxu0 0
    %92 = vmatpush1.bf16.msra.mxu0 0
    %93 = vmatprep.subr.bf16.mxu0 0
    %94 = vmatpush1.bf16.msra.mxu0 %v73
    %95 = vmatprep.subr.bf16.mxu0 0
    %96 = vmatpush2.bf16.msra.mxu0 0
    %97 = vmatprep.subr.bf16.mxu0 0
    %98 = vmatpush2.bf16.msra.mxu0 0
    %99 = vmatprep.subr.bf16.mxu0 0
    %100 = vmatpush2.bf16.msra.mxu0 0
    %101 = vmatprep.subr.bf16.mxu0 0
    %102 = vmatpush2.bf16.msra.mxu0 0
    %103 = vmatprep.subr.bf16.mxu0 0
    %104 = vmatpush2.bf16.msra.mxu0 0
    %105 = vmatprep.subr.bf16.mxu0 0
    %106 = vmatpush2.bf16.msra.mxu0 0
    %107 = vmatprep.subr.bf16.mxu0 0
    %108 = vmatpush2.bf16.msra.mxu0 0
    %109 = vmatprep.subr.bf16.mxu0 0
    %110 = vmatpush2.bf16.msra.mxu0 0
    %111 = vmatprep.mubr.bf16.mxu0 0
    %112 = vmatmul.mubr.bf16.gmra.mxu0 %v77
    %v113 = vpop.f32.mrf.mxu0
    %v114 = vadd.f32 %v63, %v113
    %v115 = vpop.f32.mrf.mxu0
    %v116 = vpop.f32.mrf.mxu0
    %v117 = vadd.f32 %v63, %v116
    %v118 = vpop.f32.mrf.mxu0
    %119 = vdwg.mxu0
    %v120 = vmax.f32 %v114, 0.0
    %v121 = vmax.f32 %v117, 0.0
    %v122 = vpack.c.bf16 %v121, %v120
    %v123 = vld [vmem:[#allocation5 + $0x8] sm:$0xf]
    %v124 = vld [vmem:[#allocation5 + $0xc] sm:$0xf]
    %v125 = vld [vmem:[#allocation5 + $0x10] sm:$0xf]
    %v126 = vld [vmem:[#allocation5 + $0x14] sm:$0xf]
    %v127 = vld [vmem:[#allocation5 + $0x18] sm:$0xf]
    %v128 = vld [vmem:[#allocation5 + $0x1c] sm:$0xf]
    %v129 = vld [vmem:[#allocation5 + $0x20] sm:$0xf]
    %v130 = vld [vmem:[#allocation5 + $0x24] sm:$0xf]
    %v131 = vld [vmem:[#allocation5 + $0x28] sm:$0xf]
    %v132 = vld [vmem:[#allocation5 + $0x2c] sm:$0xf]
    %v133 = vld [vmem:[#allocation5 + $0x30] sm:$0xf]
    %v134 = vld [vmem:[#allocation5 + $0x34] sm:$0xf]
    %v135 = vld [vmem:[#allocation5 + $0x38] sm:$0xf]
    %v136 = vld [vmem:[#allocation5 + $0x3c] sm:$0xf]
    %v137 = vld [vmem:[#allocation5 + $0x40] sm:$0xf]
    %v138 = vld [vmem:[#allocation5 + $0x44] sm:$0xf]
    %v139 = vld [vmem:[#allocation7 + $0x1] sm:$0x1]
    %v140 = vlaneseq
    %v141 = vshrl.u32 %v140, 7
    %v142 = vsub.s32 0, %v141
    %v143 = vrot.slane %v139, %v142
    %v160 = vunpack.c.l.b16 %v123
    %v161 = vunpack.c.l.b16 %v124
    %v162 = vunpack.c.l.b16 %v125
    %v163 = vunpack.c.l.b16 %v126
    %v164 = vunpack.c.l.b16 %v127
    %v165 = vunpack.c.l.b16 %v128
    %v166 = vunpack.c.l.b16 %v129
    %v167 = vunpack.c.l.b16 %v130
    %v168 = vunpack.c.l.b16 %v131
    %v169 = vunpack.c.l.b16 %v132
    %v170 = vunpack.c.l.b16 %v133
    %v171 = vunpack.c.l.b16 %v134
    %v172 = vunpack.c.l.b16 %v135
    %v173 = vunpack.c.l.b16 %v136
    %v174 = vunpack.c.l.b16 %v137
    %v175 = vunpack.c.l.b16 %v138
    %v176 = vpack.c.b16 %v161, %v160
    %v177 = vpack.c.b16 %v163, %v162
    %v178 = vpack.c.b16 %v165, %v164
    %v179 = vpack.c.b16 %v167, %v166
    %v180 = vpack.c.b16 %v169, %v168
    %v181 = vpack.c.b16 %v171, %v170
    %v182 = vpack.c.b16 %v173, %v172
    %v183 = vpack.c.b16 %v175, %v174
    %192 = vmatprep.subr.bf16.mxu0 0
    %193 = vmatpush1.bf16.msra.mxu0 %v183
    %194 = vmatprep.subr.bf16.mxu0 0
    %195 = vmatpush1.bf16.msra.mxu0 %v182
    %196 = vmatprep.subr.bf16.mxu0 0
    %197 = vmatpush1.bf16.msra.mxu0 %v181
    %198 = vmatprep.subr.bf16.mxu0 0
    %199 = vmatpush1.bf16.msra.mxu0 %v180
    %200 = vmatprep.subr.bf16.mxu0 0
    %201 = vmatpush1.bf16.msra.mxu0 %v179
    %202 = vmatprep.subr.bf16.mxu0 0
    %203 = vmatpush1.bf16.msra.mxu0 %v178
    %204 = vmatprep.subr.bf16.mxu0 0
    %205 = vmatpush1.bf16.msra.mxu0 %v177
    %206 = vmatprep.subr.bf16.mxu0 0
    %207 = vmatpush1.bf16.msra.mxu0 %v176
    %208 = vmatprep.subr.bf16.mxu0 0
    %209 = vmatpush2.bf16.msra.mxu0 0
    %210 = vmatprep.subr.bf16.mxu0 0
    %211 = vmatpush2.bf16.msra.mxu0 0
    %212 = vmatprep.subr.bf16.mxu0 0
    %213 = vmatpush2.bf16.msra.mxu0 0
    %214 = vmatprep.subr.bf16.mxu0 0
    %215 = vmatpush2.bf16.msra.mxu0 0
    %216 = vmatprep.subr.bf16.mxu0 0
    %217 = vmatpush2.bf16.msra.mxu0 0
    %218 = vmatprep.subr.bf16.mxu0 0
    %219 = vmatpush2.bf16.msra.mxu0 0
    %220 = vmatprep.subr.bf16.mxu0 0
    %221 = vmatpush2.bf16.msra.mxu0 0
    %222 = vmatprep.subr.bf16.mxu0 0
    %223 = vmatpush2.bf16.msra.mxu0 0
    %224 = vmatprep.mubr.bf16.mxu0 0
    %225 = vmatmul.mubr.bf16.gmra.mxu0 %v122
    %v226 = vpop.f32.mrf.mxu0
    %v227 = vadd.f32 %v143, %v226
    %v228 = vpop.f32.mrf.mxu0
    %v229 = vpop.f32.mrf.mxu0
    %v230 = vadd.f32 %v143, %v229
    %v231 = vpop.f32.mrf.mxu0
    %232 = vdwg.mxu0
    %v233 = vmax.f32 %v227, 0.0
    %v234 = vmax.f32 %v230, 0.0
    %v235 = vpack.c.bf16 %v234, %v233
    %v236 = vld [vmem:[#allocation5 + $0x48] sm:$0xf]
    %v237 = vld [vmem:[#allocation5 + $0x4c] sm:$0xf]
    %v238 = vld [vmem:[#allocation5 + $0x50] sm:$0xf]
    %v239 = vld [vmem:[#allocation5 + $0x54] sm:$0xf]
    %v240 = vld [vmem:[#allocation5 + $0x58] sm:$0xf]
    %v241 = vld [vmem:[#allocation5 + $0x5c] sm:$0xf]
    %v242 = vld [vmem:[#allocation5 + $0x60] sm:$0xf]
    %v243 = vld [vmem:[#allocation5 + $0x64] sm:$0xf]
    %v244 = vld [vmem:[#allocation5 + $0x68] sm:$0xf]
    %v245 = vld [vmem:[#allocation5 + $0x6c] sm:$0xf]
    %v246 = vld [vmem:[#allocation5 + $0x70] sm:$0xf]
    %v247 = vld [vmem:[#allocation5 + $0x74] sm:$0xf]
    %v248 = vld [vmem:[#allocation5 + $0x78] sm:$0xf]
    %v249 = vld [vmem:[#allocation5 + $0x7c] sm:$0xf]
    %v250 = vld [vmem:[#allocation5 + $0x80] sm:$0xf]
    %v251 = vld [vmem:[#allocation5 + $0x84] sm:$0xf]
    %v252 = vld [vmem:[#allocation7 + $0x2] sm:$0x1]
    %v253 = vlaneseq
    %v254 = vshrl.u32 %v253, 7
    %v255 = vsub.s32 0, %v254
    %v256 = vrot.slane %v252, %v255
    %v273 = vunpack.c.l.b16 %v236
    %v274 = vunpack.c.l.b16 %v237
    %v275 = vunpack.c.l.b16 %v238
    %v276 = vunpack.c.l.b16 %v239
    %v277 = vunpack.c.l.b16 %v240
    %v278 = vunpack.c.l.b16 %v241
    %v279 = vunpack.c.l.b16 %v242
    %v280 = vunpack.c.l.b16 %v243
    %v281 = vunpack.c.l.b16 %v244
    %v282 = vunpack.c.l.b16 %v245
    %v283 = vunpack.c.l.b16 %v246
    %v284 = vunpack.c.l.b16 %v247
    %v285 = vunpack.c.l.b16 %v248
    %v286 = vunpack.c.l.b16 %v249
    %v287 = vunpack.c.l.b16 %v250
    %v288 = vunpack.c.l.b16 %v251
    %v289 = vpack.c.b16 %v274, %v273
    %v290 = vpack.c.b16 %v276, %v275
    %v291 = vpack.c.b16 %v278, %v277
    %v292 = vpack.c.b16 %v280, %v279
    %v293 = vpack.c.b16 %v282, %v281
    %v294 = vpack.c.b16 %v284, %v283
    %v295 = vpack.c.b16 %v286, %v285
    %v296 = vpack.c.b16 %v288, %v287
    %305 = vmatprep.subr.bf16.mxu0 0
    %306 = vmatpush1.bf16.msra.mxu0 %v296
    %307 = vmatprep.subr.bf16.mxu0 0
    %308 = vmatpush1.bf16.msra.mxu0 %v295
    %309 = vmatprep.subr.bf16.mxu0 0
    %310 = vmatpush1.bf16.msra.mxu0 %v294
    %311 = vmatprep.subr.bf16.mxu0 0
    %312 = vmatpush1.bf16.msra.mxu0 %v293
    %313 = vmatprep.subr.bf16.mxu0 0
    %314 = vmatpush1.bf16.msra.mxu0 %v292
    %315 = vmatprep.subr.bf16.mxu0 0
    %316 = vmatpush1.bf16.msra.mxu0 %v291
    %317 = vmatprep.subr.bf16.mxu0 0
    %318 = vmatpush1.bf16.msra.mxu0 %v290
    %319 = vmatprep.subr.bf16.mxu0 0
    %320 = vmatpush1.bf16.msra.mxu0 %v289
    %321 = vmatprep.subr.bf16.mxu0 0
    %322 = vmatpush2.bf16.msra.mxu0 0
    %323 = vmatprep.subr.bf16.mxu0 0
    %324 = vmatpush2.bf16.msra.mxu0 0
    %325 = vmatprep.subr.bf16.mxu0 0
    %326 = vmatpush2.bf16.msra.mxu0 0
    %327 = vmatprep.subr.bf16.mxu0 0
    %328 = vmatpush2.bf16.msra.mxu0 0
    %329 = vmatprep.subr.bf16.mxu0 0
    %330 = vmatpush2.bf16.msra.mxu0 0
    %331 = vmatprep.subr.bf16.mxu0 0
    %332 = vmatpush2.bf16.msra.mxu0 0
    %333 = vmatprep.subr.bf16.mxu0 0
    %334 = vmatpush2.bf16.msra.mxu0 0
    %335 = vmatprep.subr.bf16.mxu0 0
    %336 = vmatpush2.bf16.msra.mxu0 0
    %337 = vmatprep.mubr.bf16.mxu0 0
    %338 = vmatmul.mubr.bf16.gmra.mxu0 %v235
    %v339 = vpop.f32.mrf.mxu0
    %v340 = vadd.f32 %v256, %v339
    %v341 = vpop.f32.mrf.mxu0
    %v342 = vpop.f32.mrf.mxu0
    %v343 = vadd.f32 %v256, %v342
    %v344 = vpop.f32.mrf.mxu0
    %345 = vdwg.mxu0
    %v346 = vmax.f32 %v340, 0.0
    %v347 = vmax.f32 %v343, 0.0
    %v348 = vpack.c.bf16 %v347, %v346
    %v349 = vld [vmem:[#allocation5 + $0x88] sm:$0xf]
    %v350 = vld [vmem:[#allocation5 + $0x8c] sm:$0xf]
    %v351 = vld [vmem:[#allocation5 + $0x90] sm:$0xf]
    %v352 = vld [vmem:[#allocation5 + $0x94] sm:$0xf]
    %v353 = vld [vmem:[#allocation5 + $0x98] sm:$0xf]
    %v354 = vld [vmem:[#allocation5 + $0x9c] sm:$0xf]
    %v355 = vld [vmem:[#allocation5 + $0xa0] sm:$0xf]
    %v356 = vld [vmem:[#allocation5 + $0xa4] sm:$0xf]
    %v357 = vld [vmem:[#allocation5 + $0xa8] sm:$0xf]
    %v358 = vld [vmem:[#allocation5 + $0xac] sm:$0xf]
    %v359 = vld [vmem:[#allocation5 + $0xb0] sm:$0xf]
    %v360 = vld [vmem:[#allocation5 + $0xb4] sm:$0xf]
    %v361 = vld [vmem:[#allocation5 + $0xb8] sm:$0xf]
    %v362 = vld [vmem:[#allocation5 + $0xbc] sm:$0xf]
    %v363 = vld [vmem:[#allocation5 + $0xc0] sm:$0xf]
    %v364 = vld [vmem:[#allocation5 + $0xc4] sm:$0xf]
    %v365 = vld [vmem:[#allocation7 + $0x3] sm:$0x1]
    %v366 = vlaneseq
    %v367 = vshrl.u32 %v366, 7
    %v368 = vsub.s32 0, %v367
    %v369 = vrot.slane %v365, %v368
    %v386 = vunpack.c.l.b16 %v349
    %v387 = vunpack.c.l.b16 %v350
    %v388 = vunpack.c.l.b16 %v351
    %v389 = vunpack.c.l.b16 %v352
    %v390 = vunpack.c.l.b16 %v353
    %v391 = vunpack.c.l.b16 %v354
    %v392 = vunpack.c.l.b16 %v355
    %v393 = vunpack.c.l.b16 %v356
    %v394 = vunpack.c.l.b16 %v357
    %v395 = vunpack.c.l.b16 %v358
    %v396 = vunpack.c.l.b16 %v359
    %v397 = vunpack.c.l.b16 %v360
    %v398 = vunpack.c.l.b16 %v361
    %v399 = vunpack.c.l.b16 %v362
    %v400 = vunpack.c.l.b16 %v363
    %v401 = vunpack.c.l.b16 %v364
    %v402 = vpack.c.b16 %v387, %v386
    %v403 = vpack.c.b16 %v389, %v388
    %v404 = vpack.c.b16 %v391, %v390
    %v405 = vpack.c.b16 %v393, %v392
    %v406 = vpack.c.b16 %v395, %v394
    %v407 = vpack.c.b16 %v397, %v396
    %v408 = vpack.c.b16 %v399, %v398
    %v409 = vpack.c.b16 %v401, %v400
    %418 = vmatprep.subr.bf16.mxu0 0
    %419 = vmatpush1.bf16.msra.mxu0 %v409
    %420 = vmatprep.subr.bf16.mxu0 0
    %421 = vmatpush1.bf16.msra.mxu0 %v408
    %422 = vmatprep.subr.bf16.mxu0 0
    %423 = vmatpush1.bf16.msra.mxu0 %v407
    %424 = vmatprep.subr.bf16.mxu0 0
    %425 = vmatpush1.bf16.msra.mxu0 %v406
    %426 = vmatprep.subr.bf16.mxu0 0
    %427 = vmatpush1.bf16.msra.mxu0 %v405
    %428 = vmatprep.subr.bf16.mxu0 0
    %429 = vmatpush1.bf16.msra.mxu0 %v404
    %430 = vmatprep.subr.bf16.mxu0 0
    %431 = vmatpush1.bf16.msra.mxu0 %v403
    %432 = vmatprep.subr.bf16.mxu0 0
    %433 = vmatpush1.bf16.msra.mxu0 %v402
    %434 = vmatprep.subr.bf16.mxu0 0
    %435 = vmatpush2.bf16.msra.mxu0 0
    %436 = vmatprep.subr.bf16.mxu0 0
    %437 = vmatpush2.bf16.msra.mxu0 0
    %438 = vmatprep.subr.bf16.mxu0 0
    %439 = vmatpush2.bf16.msra.mxu0 0
    %440 = vmatprep.subr.bf16.mxu0 0
    %441 = vmatpush2.bf16.msra.mxu0 0
    %442 = vmatprep.subr.bf16.mxu0 0
    %443 = vmatpush2.bf16.msra.mxu0 0
    %444 = vmatprep.subr.bf16.mxu0 0
    %445 = vmatpush2.bf16.msra.mxu0 0
    %446 = vmatprep.subr.bf16.mxu0 0
    %447 = vmatpush2.bf16.msra.mxu0 0
    %448 = vmatprep.subr.bf16.mxu0 0
    %449 = vmatpush2.bf16.msra.mxu0 0
    %450 = vmatprep.mubr.bf16.mxu0 0
    %451 = vmatmul.mubr.bf16.gmra.mxu0 %v348
    %v452 = vpop.f32.mrf.mxu0
    %v453 = vadd.f32 %v369, %v452
    %v454 = vpop.f32.mrf.mxu0
    %v455 = vpop.f32.mrf.mxu0
    %v456 = vadd.f32 %v369, %v455
    %v457 = vpop.f32.mrf.mxu0
    %458 = vdwg.mxu0
    %459 = vst [vmem:[#allocation8] sm:$0xff] %v453
    %460 = vst [vmem:[#allocation8 + $0x8] sm:$0xff] %v456
    // Predicated region
    $region26: #{tpu_custom_call.1} parent=1 // pred_check
      _
    $region27: #{tpu_custom_call.1} parent=1 // pred_check_branch
      %462 = sbr.rel (0) target = $region29
    $region28: #{tpu_custom_call.1} parent=1 // pred_region
      %s464 = ssub.s32 256, 256
      %465 = vsyncadd [#allocation4], %s464
      %s466 = sshll.u32 [#allocation8], 4
      %s467 = int_to_ptr.vmem [resolvable:$true] %s466
      %472 = dma.vmem_to_hbm [thread:$0]  %s467, 256, %s3, [#allocation4], 128, 128, 8
    $region29: #{tpu_custom_call.1} parent=1 // pred_fallthru
      _
    // Predicated region
    $region30: #{tpu_custom_call.1} parent=1 // pred_check
      _
    $region31: #{tpu_custom_call.1} parent=1 // pred_check_branch
      %474 = sbr.rel (0) target = $region33
    $region32: #{tpu_custom_call.1} parent=1 // pred_region
      %475 = dma.done [#allocation4], 256
    $region33: #{tpu_custom_call.1} parent=1 // pred_fallthru
      _
    %476 = vsyncpa [#allocation3], 1
    %477 = vsyncpa [#allocation6], 1
    %478 = vsyncpa [#allocation4], 1

</llo_original>
